<compile_context>
chip_gen: v7x
topology: tpu7x:2x2x1
jax: 0.10.0
libtpu: 0.0.40
codegen_flags: <defaults>
</compile_context>

<pallas_src>
import functools
import math

import jax
import jax.numpy as jnp
from jax import lax
from jax.experimental import pallas as pl
from jax.experimental.pallas import tpu as pltpu

_LANE = 128
_DEFAULT_BATCH_BLOCK = 16384  # rows per grid step (multiple of 128)


def _round_up(n, m):
    return ((n + m - 1) // m) * m


def _vpu_has_bf16():
    """True on chips whose VALUs handle bf16 natively (v6e / v7x); False on v5e and older."""
    try:
        kind = jax.devices()[0].device_kind.lower()
    except Exception:
        return False
    return any(tag in kind for tag in ("v6", "v7", "7x"))


def _mlp_kernel(x_ref, w1_ref, w2_ref, b2_ref, w3_ref, b3_ref, o_ref, *, bf16_relu):
    # Shapes (batch on the 128-lane axis after layer 1):
    #   x_ref : (Bblk, 8) bf16   -- cols 0..5 = features, col 6 = 1.0 (bias), col 7 = 0.0
    #   w1_ref: (64, 8)   bf16   -- col 6 = b1 (bias folded into the matmul)
    #   w2_ref: (32, 64)  bf16   b2_ref: (32, 1) f32
    #   w3_ref: (1, 32)   bf16   b3_ref: (1, 1)  f32
    #   o_ref : (1, Bblk) f32    -- lane-dense output
    x = x_ref[...]

    # Layer 1: Linear(6->64) + bias (folded) + ReLU. trans_b contraction over the size-8
    # feature dims -> MXU absorbs the transpose, result is (64, Bblk) f32.
    h1 = lax.dot_general(w1_ref[...], x, (((1,), (1,)), ((), ())),
                         preferred_element_type=jnp.float32)
    if bf16_relu:
        h1 = jnp.maximum(h1.astype(jnp.bfloat16), 0)          # packed bf16 ReLU (v6e/v7x)
    else:
        h1 = jnp.maximum(h1, 0.0).astype(jnp.bfloat16)         # f32 ReLU (v5e-safe)

    # Layer 2: Linear(64->32) + ReLU.
    h2 = jnp.dot(w2_ref[...], h1, preferred_element_type=jnp.float32) + b2_ref[...]
    if bf16_relu:
        h2 = jnp.maximum(h2.astype(jnp.bfloat16), 0)
    else:
        h2 = jnp.maximum(h2, 0.0).astype(jnp.bfloat16)

    # Layer 3: Linear(32->1) on the MXU (M=1 matmul), + Sigmoid via EUP exp + approx recip.
    z = jnp.dot(w3_ref[...], h2, preferred_element_type=jnp.float32) + b3_ref[...]
    o_ref[...] = pl.reciprocal(1.0 + jnp.exp(-z), approx=True).astype(o_ref.dtype)


def evolution_nn_forward(x, params, *, batch_block=_DEFAULT_BATCH_BLOCK):
    """x: (B, 6) float32. Returns (B, 1) float32 (== PyTorch EvolutionNN forward)."""
    w1, b1, w2, b2, w3, b3 = params
    B = x.shape[0]

    # Batch tile: 128-aligned, capped at batch_block; keep >= 2 grid steps when B allows
    # so a 2-TensorCore chip (v7x) can shard the batch axis.
    padB = _round_up(max(B, 1), _LANE)
    bblk = min(_round_up(batch_block, _LANE), padB)
    if padB >= 2 * _LANE:
        bblk = min(bblk, _round_up(pl.cdiv(padB, 2), _LANE))
    padded_B = _round_up(padB, bblk)
    grid = (padded_B // bblk,)

    # Wrapper-side plumbing (no transpose): pad features 6 -> 8 with a ones column
    # (folds b1 into w1) and a zero column; pad the batch; cast MXU operands to bf16.
    xa = jnp.concatenate(
        [x, jnp.ones((B, 1), x.dtype), jnp.zeros((B, 1), x.dtype)], axis=1)
    xa = jnp.pad(xa, ((0, padded_B - B), (0, 0))).astype(jnp.bfloat16)   # (padded_B, 8)

    w1b = jnp.concatenate(
        [w1, b1.reshape(-1, 1), jnp.zeros((w1.shape[0], 1), w1.dtype)],
        axis=1).astype(jnp.bfloat16)                                     # (64, 8), col 6 = b1
    w2b = w2.astype(jnp.bfloat16)                                        # (32, 64)
    w3b = w3.reshape(1, -1).astype(jnp.bfloat16)                         # (1, 32)
    b2c = b2.reshape(-1, 1).astype(jnp.float32)                          # (32, 1)
    b3c = b3.reshape(1, 1).astype(jnp.float32)                           # (1, 1)

    const = lambda i: (0, 0)
    kernel = functools.partial(_mlp_kernel, bf16_relu=_vpu_has_bf16())

    flops = 2 * padded_B * (8 * 64 + 64 * 32 + 32 * 1)
    bytes_accessed = int(
        xa.size * 2 + padded_B * 4                      # x in (bf16) + out (f32)
        + (w1b.size + w2b.size + w3b.size) * 2          # bf16 weights
        + (b2c.size + b3c.size) * 4)

    out = pl.pallas_call(
        kernel,
        out_shape=jax.ShapeDtypeStruct((1, padded_B), jnp.float32),
        grid=grid,
        in_specs=[
            pl.BlockSpec((bblk, 8), lambda i: (i, 0)),   # x: streamed over batch tiles
            pl.BlockSpec((64, 8), const),                # w1 (+ folded b1): VMEM-resident
            pl.BlockSpec((32, 64), const),               # w2
            pl.BlockSpec((32, 1), const),                # b2
            pl.BlockSpec((1, 32), const),                # w3 (row form for MXU)
            pl.BlockSpec((1, 1), const),                 # b3
        ],
        out_specs=pl.BlockSpec((1, bblk), lambda i: (0, i)),
        compiler_params=pltpu.CompilerParams(
            dimension_semantics=("parallel",),           # batch grid shards across v7x's 2 TCs
            vmem_limit_bytes=32 * 1024 * 1024,           # keep the 16K-row tile safe on v5e
        ),
        cost_estimate=pl.CostEstimate(
            flops=flops, transcendentals=2 * padded_B, bytes_accessed=bytes_accessed),
    )(xa, w1b, w2b, b2c, w3b, b3c)

    return out[0, :B].reshape(B, 1)


def init_params(key):
    """Deterministic init mimicking PyTorch nn.Linear default U[-1/sqrt(fan_in), +1/sqrt(fan_in)].

    PyTorch layout: w (out_features, in_features), b (out_features,).
    """
    layer_dims = [(6, 64), (64, 32), (32, 1)]
    params = []
    for fan_in, fan_out in layer_dims:
        key, kw, kb = jax.random.split(key, 3)
        bound = 1.0 / math.sqrt(fan_in)
        w = jax.random.uniform(kw, (fan_out, fan_in), jnp.float32, -bound, bound)
        b = jax.random.uniform(kb, (fan_out,), jnp.float32, -bound, bound)
        params += [w, b]
    return tuple(params)


def _reference_forward(x, params):
    """Pure-JAX f32 reference (identical math to the PyTorch module)."""
    w1, b1, w2, b2, w3, b3 = params
    h1 = jnp.maximum(x @ w1.T + b1, 0.0)
    h2 = jnp.maximum(h1 @ w2.T + b2, 0.0)
    return jax.nn.sigmoid(h2 @ w3.T + b3)


if __name__ == "__main__":
    key = jax.random.PRNGKey(0)
    key, kx1, kx2 = jax.random.split(key, 3)
    params = init_params(key)

    # Small case: batch=8 -> single 128-wide tile after padding (grid of 1).
    x_small = jax.random.normal(kx1, (8, 6), jnp.float32)
    out_small = jax.block_until_ready(evolution_nn_forward(x_small, params))
    ref_small = _reference_forward(x_small, params)
    assert out_small.shape == (8, 1), out_small.shape
    # bf16 MXU operands with f32 accumulation -> compare loosely against the f32 reference.
    assert jnp.allclose(out_small, ref_small, atol=2e-2, rtol=0.0), "mismatch (batch=8)"

    # Ragged case A: batch=300 with an explicit 128-row tile -> 3 grid steps.
    x_rag = jax.random.normal(kx2, (300, 6), jnp.float32)
    out_rag = jax.block_until_ready(evolution_nn_forward(x_rag, params, batch_block=128))
    ref_rag = _reference_forward(x_rag, params)
    assert out_rag.shape == (300, 1), out_rag.shape
    assert jnp.allclose(out_rag, ref_rag, atol=2e-2, rtol=0.0), "mismatch (batch=300, blk=128)"

    # Ragged case B: batch=300 with the default tile -> capped to 2 grid steps (v7x sharding path).
    out_def = jax.block_until_ready(evolution_nn_forward(x_rag, params))
    assert out_def.shape == (300, 1), out_def.shape
    assert jnp.allclose(out_def, ref_rag, atol=2e-2, rtol=0.0), "mismatch (batch=300, default blk)"

    print("KERNEL_OK")
</pallas_src>

<mosaic_0001>
module attributes {stable_mosaic.version = 11 : i64} {
  func.func @_mlp_kernel(%arg0: i32, %arg1: memref<128x8xbf16, #tpu.memory_space<vmem>>, %arg2: memref<64x8xbf16, #tpu.memory_space<vmem>>, %arg3: memref<32x64xbf16, #tpu.memory_space<vmem>>, %arg4: memref<32x1xf32, #tpu.memory_space<vmem>>, %arg5: memref<1x32xbf16, #tpu.memory_space<vmem>>, %arg6: memref<1x1xf32, #tpu.memory_space<vmem>>, %arg7: memref<1x128xf32, #tpu.memory_space<vmem>>) attributes {dimension_semantics = [#tpu.dimension_semantics<parallel>], iteration_bounds = array<i64: 1>, scalar_prefetch = 0 : i64, scratch_operands = 0 : i64, tpu.core_type = #tpu.core_type<tc>, window_params = [{transform_indices = @transform_0, window_bounds = array<i64: 128, 8>}, {pipeline_mode = #tpu.pipeline_mode<synchronous>, transform_indices = @transform_1, window_bounds = array<i64: 64, 8>}, {pipeline_mode = #tpu.pipeline_mode<synchronous>, transform_indices = @transform_2, window_bounds = array<i64: 32, 64>}, {pipeline_mode = #tpu.pipeline_mode<synchronous>, transform_indices = @transform_3, window_bounds = array<i64: 32, 1>}, {pipeline_mode = #tpu.pipeline_mode<synchronous>, transform_indices = @transform_4, window_bounds = array<i64: 1, 32>}, {pipeline_mode = #tpu.pipeline_mode<synchronous>, transform_indices = @transform_5, window_bounds = array<i64: 1, 1>}, {transform_indices = @transform_6, window_bounds = array<i64: 1, 128>}]} {
    %c0 = arith.constant 0 : index
    %c0_0 = arith.constant 0 : index
    %0 = vector.load %arg1[%c0, %c0_0] : memref<128x8xbf16, #tpu.memory_space<vmem>>, vector<128x8xbf16>
    %c0_1 = arith.constant 0 : index
    %c0_2 = arith.constant 0 : index
    %1 = vector.load %arg2[%c0_1, %c0_2] : memref<64x8xbf16, #tpu.memory_space<vmem>>, vector<64x8xbf16>
    %cst = arith.constant dense<0.000000e+00> : vector<64x128xf32>
    %2 = tpu.matmul %1, %0, %cst {dimension_numbers = #tpu.dot_dimension_numbers<[1], [1], [0], [0], [0, 0, 1, 0], [], []>} : vector<64x8xbf16>, vector<128x8xbf16>, vector<64x128xf32> -> vector<64x128xf32>
    %cst_3 = arith.constant 0.000000e+00 : f32
    %3 = vector.broadcast %cst_3 : f32 to vector<64x128xf32>
    %4 = arith.maximumf %2, %3 : vector<64x128xf32>
    %5 = arith.truncf %4 : vector<64x128xf32> to vector<64x128xbf16>
    %c0_4 = arith.constant 0 : index
    %c0_5 = arith.constant 0 : index
    %6 = vector.load %arg3[%c0_4, %c0_5] : memref<32x64xbf16, #tpu.memory_space<vmem>>, vector<32x64xbf16>
    %cst_6 = arith.constant dense<0.000000e+00> : vector<32x128xf32>
    %7 = tpu.matmul %6, %5, %cst_6 {dimension_numbers = #tpu.dot_dimension_numbers<[1], [0], [0], [1], [0, 0, 1, 1], [], []>} : vector<32x64xbf16>, vector<64x128xbf16>, vector<32x128xf32> -> vector<32x128xf32>
    %c0_7 = arith.constant 0 : index
    %c0_8 = arith.constant 0 : index
    %8 = vector.load %arg4[%c0_7, %c0_8] : memref<32x1xf32, #tpu.memory_space<vmem>>, vector<32x1xf32>
    %9 = vector.broadcast %8 : vector<32x1xf32> to vector<32x128xf32>
    %10 = arith.addf %7, %9 : vector<32x128xf32>
    %cst_9 = arith.constant 0.000000e+00 : f32
    %11 = vector.broadcast %cst_9 : f32 to vector<32x128xf32>
    %12 = arith.maximumf %10, %11 : vector<32x128xf32>
    %13 = arith.truncf %12 : vector<32x128xf32> to vector<32x128xbf16>
    %c0_10 = arith.constant 0 : index
    %c0_11 = arith.constant 0 : index
    %14 = vector.load %arg5[%c0_10, %c0_11] : memref<1x32xbf16, #tpu.memory_space<vmem>>, vector<1x32xbf16>
    %cst_12 = arith.constant dense<0.000000e+00> : vector<1x128xf32>
    %15 = tpu.matmul %14, %13, %cst_12 {dimension_numbers = #tpu.dot_dimension_numbers<[1], [0], [0], [1], [0, 0, 1, 1], [], []>} : vector<1x32xbf16>, vector<32x128xbf16>, vector<1x128xf32> -> vector<1x128xf32>
    %c0_13 = arith.constant 0 : index
    %c0_14 = arith.constant 0 : index
    %16 = vector.load %arg6[%c0_13, %c0_14] : memref<1x1xf32, #tpu.memory_space<vmem>>, vector<1x1xf32>
    %17 = vector.broadcast %16 : vector<1x1xf32> to vector<1x128xf32>
    %18 = arith.addf %15, %17 : vector<1x128xf32>
    %cst_15 = arith.constant 0.000000e+00 : f32
    %19 = vector.broadcast %cst_15 : f32 to vector<1x128xf32>
    %20 = arith.subf %19, %18 : vector<1x128xf32>
    %21 = math.exp %20 : vector<1x128xf32>
    %cst_16 = arith.constant 1.000000e+00 : f32
    %22 = vector.broadcast %cst_16 : f32 to vector<1x128xf32>
    %23 = arith.addf %22, %21 : vector<1x128xf32>
    %24 = tpu.reciprocal %23 {approx = true} : vector<1x128xf32> -> vector<1x128xf32>
    %c0_17 = arith.constant 0 : index
    %c0_18 = arith.constant 0 : index
    %25 = vector.load %arg7[%c0_17, %c0_18] : memref<1x128xf32, #tpu.memory_space<vmem>>, vector<1x128xf32>
    tpu.vector_store %arg7[%c0_17, %c0_18], %24 {strides = array<i32>} : memref<1x128xf32, #tpu.memory_space<vmem>>, vector<1x128xf32>,
    return
  }
  func.func @transform_0(%arg0: i32) -> (i32, i32) {
    %c0_i32 = arith.constant 0 : i32
    %c0_i32_0 = arith.constant 0 : i32
    return %arg0, %c0_i32 : i32, i32
  }
  func.func @transform_1(%arg0: i32) -> (i32, i32) {
    %c0_i32 = arith.constant 0 : i32
    %c0_i32_0 = arith.constant 0 : i32
    %c0_i32_1 = arith.constant 0 : i32
    return %c0_i32, %c0_i32_0 : i32, i32
  }
  func.func @transform_2(%arg0: i32) -> (i32, i32) {
    %c0_i32 = arith.constant 0 : i32
    %c0_i32_0 = arith.constant 0 : i32
    %c0_i32_1 = arith.constant 0 : i32
    return %c0_i32, %c0_i32_0 : i32, i32
  }
  func.func @transform_3(%arg0: i32) -> (i32, i32) {
    %c0_i32 = arith.constant 0 : i32
    %c0_i32_0 = arith.constant 0 : i32
    %c0_i32_1 = arith.constant 0 : i32
    return %c0_i32, %c0_i32_0 : i32, i32
  }
  func.func @transform_4(%arg0: i32) -> (i32, i32) {
    %c0_i32 = arith.constant 0 : i32
    %c0_i32_0 = arith.constant 0 : i32
    %c0_i32_1 = arith.constant 0 : i32
    return %c0_i32, %c0_i32_0 : i32, i32
  }
  func.func @transform_5(%arg0: i32) -> (i32, i32) {
    %c0_i32 = arith.constant 0 : i32
    %c0_i32_0 = arith.constant 0 : i32
    %c0_i32_1 = arith.constant 0 : i32
    return %c0_i32, %c0_i32_0 : i32, i32
  }
  func.func @transform_6(%arg0: i32) -> (i32, i32) {
    %c0_i32 = arith.constant 0 : i32
    %c0_i32_0 = arith.constant 0 : i32
    return %c0_i32, %arg0 : i32, i32
  }
}

</mosaic_0001>

<llo_original>
// kernel: tpu_custom_call.1
$region0: #{tpu_custom_call.1}
  #allocation0 [shape = 'u32[]', space=smem, size = 0x4, offset = 0x4, fixed_abs, tag = 'smem constant byte address 0x4 - core index']
  #allocation1 [shape = 'u32[144,128]{1,0:T(1,128)}', space=vmem, size = 0x12000, scoped, tag = 'internal scratch']
  #allocation2 [shape = 'f32[1,1]{1,0:T(1,128)S(1)}', space=vmem, size = 0x200, scoped, tag = 'scoped memory for tpu_custom_call.1']
  %s0 = inlined_call_operand.vmem [shape: bf16[128,8], index: 0, kind: input, shape index: {}]
  %s1 = inlined_call_operand.vmem [shape: bf16[64,8], index: 1, kind: input, shape index: {}]
  %s2 = inlined_call_operand.vmem [shape: bf16[32,64], index: 2, kind: input, shape index: {}]
  %s3 = inlined_call_operand.vmem [shape: f32[32,1], index: 3, kind: input, shape index: {}]
  %s4 = inlined_call_operand.vmem [shape: bf16[1,32], index: 4, kind: input, shape index: {}]
  %s5 = inlined_call_operand.<no memory space> [shape: f32[1,1], index: 5, kind: input, shape index: {}]
  %s6 = inlined_call_operand.hbm [shape: f32[1,128], index: 6, kind: output, shape index: {}]
  %s7 = sld [smem:[#allocation0]]
  $region34: #{tpu_custom_call.1} parent=0
    _
  %s9 = ssub.s32 1, %s7
  %s10 = scalar_select 0, %s9, %s7
  %v11 = vstv %s5
  %12 = vst [vmem:[#allocation2] sm:$0x1] %v11
  $region1: #{tpu_custom_call.1} parent=0
    #allocation3 [shape = 'u8[512]{0}', space=vmem, size = 0x400, scoped, tag = 'output window, operand 0, single buffered']
    #allocation4 [shape = 's32[1]{0}', space=sflag, size = 0x4, scoped, tag = 'scoped memory for tpu_custom_call.1']
    %13 = vsyncpa [#allocation4], 0
    // Predicated region
    $region2: #{tpu_custom_call.1} parent=1 // pred_check
      _
    $region3: #{tpu_custom_call.1} parent=1 // pred_check_branch
      %15 = sbr.rel (0) target = $region5
    $region4: #{tpu_custom_call.1} parent=1 // pred_region
      _
    $region5: #{tpu_custom_call.1} parent=1 // pred_fallthru
      _
    // Predicated region
    $region6: #{tpu_custom_call.1} parent=1 // pred_check
      _
    $region7: #{tpu_custom_call.1} parent=1 // pred_check_branch
      %17 = sbr.rel (0) target = $region9
    $region8: #{tpu_custom_call.1} parent=1 // pred_region
      _
    $region9: #{tpu_custom_call.1} parent=1 // pred_fallthru
      _
    // Predicated region
    $region10: #{tpu_custom_call.1} parent=1 // pred_check
      _
    $region11: #{tpu_custom_call.1} parent=1 // pred_check_branch
      %19 = sbr.rel (0) target = $region13
    $region12: #{tpu_custom_call.1} parent=1 // pred_region
      _
    $region13: #{tpu_custom_call.1} parent=1 // pred_fallthru
      _
    // Predicated region
    $region14: #{tpu_custom_call.1} parent=1 // pred_check
      _
    $region15: #{tpu_custom_call.1} parent=1 // pred_check_branch
      %21 = sbr.rel (0) target = $region17
    $region16: #{tpu_custom_call.1} parent=1 // pred_region
      _
    $region17: #{tpu_custom_call.1} parent=1 // pred_fallthru
      _
    // Predicated region
    $region18: #{tpu_custom_call.1} parent=1 // pred_check
      _
    $region19: #{tpu_custom_call.1} parent=1 // pred_check_branch
      %23 = sbr.rel (0) target = $region21
    $region20: #{tpu_custom_call.1} parent=1 // pred_region
      _
    $region21: #{tpu_custom_call.1} parent=1 // pred_fallthru
      _
    // Predicated region
    $region22: #{tpu_custom_call.1} parent=1 // pred_check
      _
    $region23: #{tpu_custom_call.1} parent=1 // pred_check_branch
      %25 = sbr.rel (0) target = $region25
    $region24: #{tpu_custom_call.1} parent=1 // pred_region
      _
    $region25: #{tpu_custom_call.1} parent=1 // pred_fallthru
      _
    %v27 = vld [vmem:[%s0] sm:$0xf]
    %v28 = vld [vmem:[%s0 + $0x4] sm:$0xf]
    %v29 = vld [vmem:[%s0 + $0x8] sm:$0xf]
    %v30 = vld [vmem:[%s0 + $0xc] sm:$0xf]
    %v31 = vld [vmem:[%s0 + $0x10] sm:$0xf]
    %v32 = vld [vmem:[%s0 + $0x14] sm:$0xf]
    %v33 = vld [vmem:[%s0 + $0x18] sm:$0xf]
    %v34 = vld [vmem:[%s0 + $0x1c] sm:$0xf]
    %v35 = vld [vmem:[%s0 + $0x20] sm:$0xf]
    %v36 = vld [vmem:[%s0 + $0x24] sm:$0xf]
    %v37 = vld [vmem:[%s0 + $0x28] sm:$0xf]
    %v38 = vld [vmem:[%s0 + $0x2c] sm:$0xf]
    %v39 = vld [vmem:[%s0 + $0x30] sm:$0xf]
    %v40 = vld [vmem:[%s0 + $0x34] sm:$0xf]
    %v41 = vld [vmem:[%s0 + $0x38] sm:$0xf]
    %v42 = vld [vmem:[%s0 + $0x3c] sm:$0xf]
    %v43 = vld [vmem:[%s1] sm:$0xf]
    %v44 = vld [vmem:[%s1 + $0x4] sm:$0xf]
    %v45 = vld [vmem:[%s1 + $0x8] sm:$0xf]
    %v46 = vld [vmem:[%s1 + $0xc] sm:$0xf]
    %v47 = vld [vmem:[%s1 + $0x10] sm:$0xf]
    %v48 = vld [vmem:[%s1 + $0x14] sm:$0xf]
    %v49 = vld [vmem:[%s1 + $0x18] sm:$0xf]
    %v50 = vld [vmem:[%s1 + $0x1c] sm:$0xf]
    %v59 = vunpack.c.l.b16 %v43
    %v60 = vunpack.c.l.b16 %v44
    %v61 = vunpack.c.l.b16 %v45
    %v62 = vunpack.c.l.b16 %v46
    %v63 = vunpack.c.l.b16 %v47
    %v64 = vunpack.c.l.b16 %v48
    %v65 = vunpack.c.l.b16 %v49
    %v66 = vunpack.c.l.b16 %v50
    %v67 = vpack.c.b16 %v60, %v59
    %v68 = vpack.c.b16 %v62, %v61
    %v69 = vpack.c.b16 %v64, %v63
    %v70 = vpack.c.b16 %v66, %v65
    %v87 = vunpack.c.l.b16 %v27
    %v88 = vunpack.c.l.b16 %v28
    %v89 = vunpack.c.l.b16 %v29
    %v90 = vunpack.c.l.b16 %v30
    %v91 = vunpack.c.l.b16 %v31
    %v92 = vunpack.c.l.b16 %v32
    %v93 = vunpack.c.l.b16 %v33
    %v94 = vunpack.c.l.b16 %v34
    %v95 = vunpack.c.l.b16 %v35
    %v96 = vunpack.c.l.b16 %v36
    %v97 = vunpack.c.l.b16 %v37
    %v98 = vunpack.c.l.b16 %v38
    %v99 = vunpack.c.l.b16 %v39
    %v100 = vunpack.c.l.b16 %v40
    %v101 = vunpack.c.l.b16 %v41
    %v102 = vunpack.c.l.b16 %v42
    %v103 = vpack.c.b16 %v88, %v87
    %v104 = vpack.c.b16 %v90, %v89
    %v105 = vpack.c.b16 %v92, %v91
    %v106 = vpack.c.b16 %v94, %v93
    %v107 = vpack.c.b16 %v96, %v95
    %v108 = vpack.c.b16 %v98, %v97
    %v109 = vpack.c.b16 %v100, %v99
    %v110 = vpack.c.b16 %v102, %v101
    %vm111 = vcmask 64512
    %v113 = vsel %vm111, %v67, 0
    %v116 = vsel %vm111, %v68, 0
    %v119 = vsel %vm111, %v69, 0
    %v122 = vsel %vm111, %v70, 0
    %v125 = vsel %vm111, %v103, 0
    %v128 = vsel %vm111, %v104, 0
    %v131 = vsel %vm111, %v105, 0
    %v134 = vsel %vm111, %v106, 0
    %v137 = vsel %vm111, %v107, 0
    %v140 = vsel %vm111, %v108, 0
    %v143 = vsel %vm111, %v109, 0
    %v146 = vsel %vm111, %v110, 0
    %148 = vmatprep.subr.bf16.mxu0 0
    %149 = vmatpush1.bf16.xpose.msra.mxu0 %v125
    %150 = vmatprep.subr.bf16.mxu0 0
    %151 = vmatpush1.bf16.xpose.msra.mxu0 %v128
    %152 = vmatprep.subr.bf16.mxu0 0
    %153 = vmatpush1.bf16.xpose.msra.mxu0 %v131
    %154 = vmatprep.subr.bf16.mxu0 0
    %155 = vmatpush1.bf16.xpose.msra.mxu0 %v134
    %156 = vmatprep.subr.bf16.mxu0 0
    %157 = vmatpush1.bf16.xpose.msra.mxu0 %v137
    %158 = vmatprep.subr.bf16.mxu0 0
    %159 = vmatpush1.bf16.xpose.msra.mxu0 %v140
    %160 = vmatprep.subr.bf16.mxu0 0
    %161 = vmatpush1.bf16.xpose.msra.mxu0 %v143
    %162 = vmatprep.subr.bf16.mxu0 0
    %163 = vmatpush1.bf16.xpose.msra.mxu0 %v146
    %164 = vmatprep.subr.bf16.mxu0 0
    %165 = vmatpush1.bf16.xpose.msra.mxu0 0
    %166 = vmatprep.subr.bf16.mxu0 0
    %167 = vmatpush1.bf16.xpose.msra.mxu0 0
    %168 = vmatprep.subr.bf16.mxu0 0
    %169 = vmatpush1.bf16.xpose.msra.mxu0 0
    %170 = vmatprep.subr.bf16.mxu0 0
    %171 = vmatpush1.bf16.xpose.msra.mxu0 0
    %172 = vmatprep.subr.bf16.mxu0 0
    %173 = vmatpush1.bf16.xpose.msra.mxu0 0
    %174 = vmatprep.subr.bf16.mxu0 0
    %175 = vmatpush1.bf16.xpose.msra.mxu0 0
    %176 = vmatprep.subr.bf16.mxu0 0
    %177 = vmatpush1.bf16.xpose.msra.mxu0 0
    %178 = vmatprep.subr.bf16.mxu0 0
    %179 = vmatpush1.bf16.xpose.msra.mxu0 0
    %180 = vmatprep.mubr.bf16.mxu0 0
    %181 = vmatmul.mubr.bf16.gmra.mrb[0].mxu0 %v113
    %v182 = vpop.f32.mrb[0].mxu0
    %v183 = vadd.f32 0.0, %v182
    %v184 = vpop.f32.mrb[0].mxu0
    %v185 = vpop.f32.mrb[0].mxu0
    %v186 = vadd.f32 0.0, %v185
    %v187 = vpop.f32.mrb[0].mxu0
    %188 = vmatprep.mubr.bf16.mxu0 0
    %189 = vmatmul.mubr.bf16.gmra.mrb[0].mxu0 %v116
    %v190 = vpop.f32.mrb[0].mxu0
    %v191 = vadd.f32 0.0, %v190
    %v192 = vpop.f32.mrb[0].mxu0
    %v193 = vpop.f32.mrb[0].mxu0
    %v194 = vadd.f32 0.0, %v193
    %v195 = vpop.f32.mrb[0].mxu0
    %196 = vmatprep.mubr.bf16.mxu0 0
    %197 = vmatmul.mubr.bf16.gmra.mrb[0].mxu0 %v119
    %v198 = vpop.f32.mrb[0].mxu0
    %v199 = vadd.f32 0.0, %v198
    %v200 = vpop.f32.mrb[0].mxu0
    %v201 = vpop.f32.mrb[0].mxu0
    %v202 = vadd.f32 0.0, %v201
    %v203 = vpop.f32.mrb[0].mxu0
    %204 = vmatprep.mubr.bf16.mxu0 0
    %205 = vmatmul.mubr.bf16.gmra.mrb[0].mxu0 %v122
    %v206 = vpop.f32.mrb[0].mxu0
    %v207 = vadd.f32 0.0, %v206
    %v208 = vpop.f32.mrb[0].mxu0
    %v209 = vpop.f32.mrb[0].mxu0
    %v210 = vadd.f32 0.0, %v209
    %v211 = vpop.f32.mrb[0].mxu0
    %212 = vdwg.mxu0
    %v213 = vmax.f32 %v183, 0.0
    %v214 = vmax.f32 %v186, 0.0
    %v215 = vmax.f32 %v191, 0.0
    %v216 = vmax.f32 %v194, 0.0
    %v217 = vmax.f32 %v199, 0.0
    %v218 = vmax.f32 %v202, 0.0
    %v219 = vmax.f32 %v207, 0.0
    %v220 = vmax.f32 %v210, 0.0
    %v221 = vpack.c.bf16 %v214, %v213
    %v222 = vpack.c.bf16 %v216, %v215
    %v223 = vpack.c.bf16 %v218, %v217
    %v224 = vpack.c.bf16 %v220, %v219
    %v225 = vld [vmem:[%s2] sm:$0xf]
    %v226 = vld [vmem:[%s2 + $0x4] sm:$0xf]
    %v227 = vld [vmem:[%s2 + $0x8] sm:$0xf]
    %v228 = vld [vmem:[%s2 + $0xc] sm:$0xf]
    %v229 = vld [vmem:[%s3] sm:$0xff]
    %v230 = vld [vmem:[%s3 + $0x8] sm:$0xff]
    %v231 = vld [vmem:[%s3 + $0x10] sm:$0xff]
    %v232 = vld [vmem:[%s3 + $0x18] sm:$0xff]
    %234 = vset.pattern.permute.xlu0 0
    %235 = vperm.xlu0 %234, %v229
    %v236 = vpop.permute.xlu0 %235
    %239 = vset.pattern.permute.xlu0 0
    %240 = vperm.xlu0 %239, %v230
    %v241 = vpop.permute.xlu0 %240
    %244 = vset.pattern.permute.xlu0 0
    %245 = vperm.xlu0 %244, %v231
    %v246 = vpop.permute.xlu0 %245
    %249 = vset.pattern.permute.xlu0 0
    %250 = vperm.xlu0 %249, %v232
    %v251 = vpop.permute.xlu0 %250
    %v257 = vunpack.c.l.b16 %v225
    %v258 = vunpack.c.l.b16 %v226
    %v259 = vunpack.c.l.b16 %v227
    %v260 = vunpack.c.l.b16 %v228
    %v261 = vpack.c.b16 %v258, %v257
    %v262 = vpack.c.b16 %v260, %v259
    %vm263 = vcmask 523264
    %v265 = vsel %vm263, %v261, 0
    %v268 = vsel %vm263, %v262, 0
    %270 = vmatprep.subr.bf16.mxu0 0
    %271 = vmatpush1.bf16.msra.mxu0 %v221
    %272 = vmatprep.subr.bf16.mxu0 0
    %273 = vmatpush1.bf16.msra.mxu0 %v222
    %274 = vmatprep.subr.bf16.mxu0 0
    %275 = vmatpush1.bf16.msra.mxu0 %v223
    %276 = vmatprep.subr.bf16.mxu0 0
    %277 = vmatpush1.bf16.msra.mxu0 %v224
    %278 = vmatprep.subr.bf16.mxu0 0
    %279 = vmatpush1.bf16.msra.mxu0 0
    %280 = vmatprep.subr.bf16.mxu0 0
    %281 = vmatpush1.bf16.msra.mxu0 0
    %282 = vmatprep.subr.bf16.mxu0 0
    %283 = vmatpush1.bf16.msra.mxu0 0
    %284 = vmatprep.subr.bf16.mxu0 0
    %285 = vmatpush1.bf16.msra.mxu0 0
    %286 = vmatprep.subr.bf16.mxu0 0
    %287 = vmatpush1.bf16.msra.mxu0 0
    %288 = vmatprep.subr.bf16.mxu0 0
    %289 = vmatpush1.bf16.msra.mxu0 0
    %290 = vmatprep.subr.bf16.mxu0 0
    %291 = vmatpush1.bf16.msra.mxu0 0
    %292 = vmatprep.subr.bf16.mxu0 0
    %293 = vmatpush1.bf16.msra.mxu0 0
    %294 = vmatprep.subr.bf16.mxu0 0
    %295 = vmatpush1.bf16.msra.mxu0 0
    %296 = vmatprep.subr.bf16.mxu0 0
    %297 = vmatpush1.bf16.msra.mxu0 0
    %298 = vmatprep.subr.bf16.mxu0 0
    %299 = vmatpush1.bf16.msra.mxu0 0
    %300 = vmatprep.subr.bf16.mxu0 0
    %301 = vmatpush1.bf16.msra.mxu0 0
    %302 = vmatprep.mubr.bf16.mxu0 0
    %303 = vmatmul.mubr.bf16.gmra.mrb[0].mxu0 %v265
    %v304 = vpop.f32.mrb[0].mxu0
    %v305 = vadd.f32 %v236, %v304
    %v306 = vpop.f32.mrb[0].mxu0
    %v307 = vpop.f32.mrb[0].mxu0
    %v308 = vadd.f32 %v241, %v307
    %v309 = vpop.f32.mrb[0].mxu0
    %310 = vmatprep.mubr.bf16.mxu0 0
    %311 = vmatmul.mubr.bf16.gmra.mrb[0].mxu0 %v268
    %v312 = vpop.f32.mrb[0].mxu0
    %v313 = vadd.f32 %v246, %v312
    %v314 = vpop.f32.mrb[0].mxu0
    %v315 = vpop.f32.mrb[0].mxu0
    %v316 = vadd.f32 %v251, %v315
    %v317 = vpop.f32.mrb[0].mxu0
    %318 = vdwg.mxu0
    %v319 = vmax.f32 %v305, 0.0
    %v320 = vmax.f32 %v308, 0.0
    %v321 = vmax.f32 %v313, 0.0
    %v322 = vmax.f32 %v316, 0.0
    %v323 = vpack.c.bf16 %v320, %v319
    %v324 = vpack.c.bf16 %v322, %v321
    %v325 = vld [vmem:[%s4] sm:$0x1]
    %v326 = vld [vmem:[#allocation2] sm:$0x1]
    %328 = vset.pattern.permute.xlu0 0
    %329 = vperm.xlu0 %328, %v326
    %v330 = vpop.permute.xlu0 %329
    %v332 = vlaneseq
    %v333 = vshrl.u32 %v332, 7
    %v334 = vsub.s32 0, %v333
    %v335 = vrot.slane %v330, %v334
    %vm336 = vcmask 261120
    %v338 = vsel %vm336, %v325, 0
    %340 = vmatprep.subr.bf16.mxu0 0
    %341 = vmatpush1.bf16.msra.mxu0 %v323
    %342 = vmatprep.subr.bf16.mxu0 0
    %343 = vmatpush1.bf16.msra.mxu0 %v324
    %344 = vmatprep.subr.bf16.mxu0 0
    %345 = vmatpush1.bf16.msra.mxu0 0
    %346 = vmatprep.subr.bf16.mxu0 0
    %347 = vmatpush1.bf16.msra.mxu0 0
    %348 = vmatprep.subr.bf16.mxu0 0
    %349 = vmatpush1.bf16.msra.mxu0 0
    %350 = vmatprep.subr.bf16.mxu0 0
    %351 = vmatpush1.bf16.msra.mxu0 0
    %352 = vmatprep.subr.bf16.mxu0 0
    %353 = vmatpush1.bf16.msra.mxu0 0
    %354 = vmatprep.subr.bf16.mxu0 0
    %355 = vmatpush1.bf16.msra.mxu0 0
    %356 = vmatprep.subr.bf16.mxu0 0
    %357 = vmatpush1.bf16.msra.mxu0 0
    %358 = vmatprep.subr.bf16.mxu0 0
    %359 = vmatpush1.bf16.msra.mxu0 0
    %360 = vmatprep.subr.bf16.mxu0 0
    %361 = vmatpush1.bf16.msra.mxu0 0
    %362 = vmatprep.subr.bf16.mxu0 0
    %363 = vmatpush1.bf16.msra.mxu0 0
    %364 = vmatprep.subr.bf16.mxu0 0
    %365 = vmatpush1.bf16.msra.mxu0 0
    %366 = vmatprep.subr.bf16.mxu0 0
    %367 = vmatpush1.bf16.msra.mxu0 0
    %368 = vmatprep.subr.bf16.mxu0 0
    %369 = vmatpush1.bf16.msra.mxu0 0
    %370 = vmatprep.subr.bf16.mxu0 0
    %371 = vmatpush1.bf16.msra.mxu0 0
    %372 = vmatprep.mubr.bf16.mxu0 0
    %373 = vmatmul.mubr.bf16.gmra.mrb[0].mxu0 %v338
    %v374 = vpop.f32.mrb[0].mxu0
    %v375 = vadd.f32 %v335, %v374
    %v376 = vpop.f32.mrb[0].mxu0
    %v377 = vpop.f32.mrb[0].mxu0
    %v378 = vpop.f32.mrb[0].mxu0
    %379 = vdwg.mxu0
    %v380 = vsub.f32 0.0, %v375
    %v381 = vmul.f32 %v380, 1.442695
    %v382 = vpow.pop %v381
    %v383 = vadd.f32 %v382, 1.0
    %v384 = vrcp.pop %v383
    %385 = vst [vmem:[#allocation3] sm:$0x1] %v384
    // Predicated region
    $region26: #{tpu_custom_call.1} parent=1 // pred_check
      _
    $region27: #{tpu_custom_call.1} parent=1 // pred_check_branch
      %387 = sbr.rel (0) target = $region29
    $region28: #{tpu_custom_call.1} parent=1 // pred_region
      %s389 = ssub.s32 16, 16
      %390 = vsyncadd [#allocation4], %s389
      %s392 = sshll.u32 [#allocation3], 4
      %s393 = int_to_ptr.vmem [resolvable:$true] %s392
      %395 = dma.vmem_to_hbm [thread:$0]  %s393, 16, %s6, [#allocation4]
    $region29: #{tpu_custom_call.1} parent=1 // pred_fallthru
      _
    // Predicated region
    $region30: #{tpu_custom_call.1} parent=1 // pred_check
      _
    $region31: #{tpu_custom_call.1} parent=1 // pred_check_branch
      %397 = sbr.rel (0) target = $region33
    $region32: #{tpu_custom_call.1} parent=1 // pred_region
      %398 = dma.done [#allocation4], 16
    $region33: #{tpu_custom_call.1} parent=1 // pred_fallthru
      _
    %399 = vsyncpa [#allocation4], 1

</llo_original>
